<compile_context>
chip_gen: v6e
topology: v6e:2x2x1
jax: 0.10.0
libtpu: 0.0.40
codegen_flags: <defaults>
</compile_context>

<pallas_src>
import functools

import jax
import jax.numpy as jnp
from jax.experimental import pallas as pl
from jax.experimental.pallas import tpu as pltpu

NEG_SLOPE = 0.01  # nn.LeakyReLU default


def _leaky_relu(h):
    return jnp.where(h > 0, h, NEG_SLOPE * h)


def _round_up(x, m):
    return ((x + m - 1) // m) * m


def _block_diag(blocks):
    """Dense block-diagonal matrix from equal-shape 2D blocks (pack-time only)."""
    n = len(blocks)
    r, c = blocks[0].shape
    out = jnp.zeros((n * r, n * c), blocks[0].dtype)
    for i, blk in enumerate(blocks):
        out = out.at[i * r:(i + 1) * r, i * c:(i + 1) * c].set(blk)
    return out


# ---------------------------------------------------------------------------
# Kernel: whole ensemble = two lane-dense 2D matmuls + a VPU segmented reduce.
# One grid axis over the (padded) batch.
# ---------------------------------------------------------------------------
def _reward_nets_kernel(x_ref, w1_ref, w2_ref, bw_ref, out_ref, *, net_num,
                        hidden_dim):
    """
    x_ref:   (TB, Din)   f32; Din = D (shared input) or N*D (per-net list input)
    w1_ref:  (Din, N*H)  matmul dtype (pre-cast at pack time)
    w2_ref:  (N*H, N*H)  matmul dtype, block-diagonal (off-diag exactly zero)
    bw_ref:  (4, N*H)    f32 rows: [b1, b2, w3, b3/H broadcast over H]
    out_ref: (N, TB)     f32, batch on the lane axis
    """
    N, H = net_num, hidden_dim
    mm_dtype = w1_ref.dtype

    x = x_ref[...].astype(mm_dtype)           # fresh per-call input: cast in-kernel
    bw = bw_ref[...]
    b1, b2, w3, b3h = bw[0:1], bw[1:2], bw[2:3], bw[3:4]   # each (1, N*H) f32

    # Layer 1: one MXU matmul for all nets, f32 accumulation.
    h1 = jnp.dot(x, w1_ref[...], preferred_element_type=jnp.float32)
    h1 = _leaky_relu(h1 + b1)

    # Layer 2: block-diagonal (N*H, N*H) matmul.
    h2 = jnp.dot(h1.astype(mm_dtype), w2_ref[...],
                 preferred_element_type=jnp.float32)
    h2 = _leaky_relu(h2 + b2)

    # Final (H -> 1) projection per net on the VPU/XLU: h2*w3 + b3/H, then a
    # lane-segment reduce over each net's H lanes (the b3/H terms sum to b3).
    prod = h2 * w3 + b3h                                        # (TB, N*H)
    out_bn = jnp.concatenate(
        [jnp.sum(prod[:, n * H:(n + 1) * H], axis=-1, keepdims=True)
         for n in range(N)], axis=-1)                           # (TB, N)
    out_ref[...] = out_bn.T.astype(out_ref.dtype)               # (N, TB) single store


# ---------------------------------------------------------------------------
# One-time parameter packing (hoisted out of the forward path).
# ---------------------------------------------------------------------------
def pack_params(params, *, matmul_dtype=jnp.bfloat16):
    """Pack per-net params into fused, kernel-ready arrays.

    Call once per parameter update, NOT per forward call.  matmul_dtype=bf16
    is the fast path on the bf16-native MXUs; use jnp.float32 for tight parity
    with the PyTorch f32 module.
    """
    w1, b1 = params["w1"], params["b1"]   # (N, D, H), (N, 1, H)
    w2, b2 = params["w2"], params["b2"]   # (N, H, H), (N, 1, H)
    w3, b3 = params["w3"], params["b3"]   # (N, H, 1), (N, 1, 1)
    N, D, H = w1.shape
    NH = N * H

    # Shared-input path: layer 1 as one (D, N*H) matmul over all nets.
    w1_shared = jnp.transpose(w1, (1, 0, 2)).reshape(D, NH).astype(matmul_dtype)
    # Per-net-input (list) path: block-diagonal (N*D, N*H).
    w1_list = _block_diag([w1[n] for n in range(N)]).astype(matmul_dtype)
    # Layer 2: block-diagonal so each net only sees its own activations.
    w2_bd = _block_diag([w2[n] for n in range(N)]).astype(matmul_dtype)

    # Single f32 slab for everything used on the VPU (one DMA, 4 inputs total):
    #   row 0: b1, row 1: b2, row 2: w3, row 3: b3/H broadcast over H lanes.
    bw = jnp.stack([
        b1[:, 0, :].reshape(NH),
        b2[:, 0, :].reshape(NH),
        w3[:, :, 0].reshape(NH),
        jnp.repeat(b3[:, 0, 0] / H, H),
    ]).astype(jnp.float32)

    return {"w1_shared": w1_shared, "w1_list": w1_list, "w2_bd": w2_bd,
            "bw": bw, "net_num": int(N), "input_dim": int(D),
            "hidden_dim": int(H)}


# ---------------------------------------------------------------------------
# Forward wrapper.
# ---------------------------------------------------------------------------
def reward_nets_forward(x, packed, *, block_b=128, return_list=False):
    """Forward pass of the ensemble.

    x: a single [B, D] array shared by all nets, or a list/tuple of net_num
       [B, D] arrays (one per net) -- mirroring the PyTorch forward.
    Returns a stacked (N, B, 1) array; return_list=True gives the
    PyTorch-style list of N [B, 1] arrays.
    """
    N, D, H = packed["net_num"], packed["input_dim"], packed["hidden_dim"]
    NH = N * H

    if isinstance(x, (list, tuple)):
        assert len(x) == N, "per-net input list must have net_num entries"
        x_in = jnp.concatenate([jnp.asarray(xi, jnp.float32) for xi in x],
                               axis=-1)                     # (B, N*D)
        w1 = packed["w1_list"]
    else:
        x_in = jnp.asarray(x, jnp.float32)                  # (B, D)
        w1 = packed["w1_shared"]
    B, Din = x_in.shape
    w2, bw = packed["w2_bd"], packed["bw"]

    # --- Batch block choice + conservative VMEM budget (fits v5e's 16 MiB
    # scoped default; v7x has 64 MiB physical / 32 MiB scoped default). ---
    w_bytes = (w1.size * w1.dtype.itemsize + w2.size * w2.dtype.itemsize
               + bw.size * bw.dtype.itemsize)

    def vmem_need(b):
        return (2 * w_bytes                  # weights (assume double-buffered)
                + 2 * b * Din * 4            # x block, double-buffered
                + 2 * N * b * 4              # out block, double-buffered
                + 3 * b * NH * 4)            # h1/h2/prod f32 intermediates

    budget = 12 * 1024 * 1024
    if B <= block_b and vmem_need(_round_up(B, 8)) <= budget:
        bb = _round_up(B, 8)                 # single batch block (full lane dim)
    else:
        bb = max(128, _round_up(block_b, 128))   # tiled: lane dim multiple of 128
        while bb > 128 and vmem_need(bb) > budget:
            bb -= 128

    B_pad = _round_up(B, bb)
    if B_pad != B:
        x_in = jnp.pad(x_in, ((0, B_pad - B), (0, 0)))

    kernel = functools.partial(_reward_nets_kernel, net_num=N, hidden_dim=H)
    out_nb = pl.pallas_call(
        kernel,
        out_shape=jax.ShapeDtypeStruct((N, B_pad), jnp.float32),
        grid_spec=pltpu.PrefetchScalarGridSpec(
            num_scalar_prefetch=0,
            grid=(B_pad // bb,),
            in_specs=[
                pl.BlockSpec((bb, Din), lambda i: (i, 0)),   # x tiled over batch
                pl.BlockSpec((Din, NH), lambda i: (0, 0)),   # weights: constant
                pl.BlockSpec((NH, NH), lambda i: (0, 0)),    #  index_maps -> stay
                pl.BlockSpec((4, NH), lambda i: (0, 0)),     #  VMEM-resident
            ],
            out_specs=pl.BlockSpec((N, bb), lambda i: (0, i)),
        ),
        compiler_params=pltpu.CompilerParams(
            dimension_semantics=("parallel",)),
    )(x_in, w1, w2, bw)

    out = out_nb[:, :B, None]                 # (N, B, 1)
    if return_list:
        # Opt-in PyTorch-API parity (creates N small device slices).
        return [out[i] for i in range(N)]
    return out


def init_params(key, net_num, input_dim, hidden_dim):
    """Deterministic synthetic parameters, stacked per net (PyTorch layout)."""
    ks = jax.random.split(key, 6)
    scale = 0.1
    return {
        "w1": scale * jax.random.normal(ks[0], (net_num, input_dim, hidden_dim), jnp.float32),
        "b1": scale * jax.random.normal(ks[1], (net_num, 1, hidden_dim), jnp.float32),
        "w2": scale * jax.random.normal(ks[2], (net_num, hidden_dim, hidden_dim), jnp.float32),
        "b2": scale * jax.random.normal(ks[3], (net_num, 1, hidden_dim), jnp.float32),
        "w3": scale * jax.random.normal(ks[4], (net_num, hidden_dim, 1), jnp.float32),
        "b3": scale * jax.random.normal(ks[5], (net_num, 1, 1), jnp.float32),
    }


def _reference_forward(x, params):
    """Pure-JAX reference matching the PyTorch semantics. Returns (N, B, 1)."""
    w1, b1 = params["w1"], params["b1"]
    w2, b2 = params["w2"], params["b2"]
    w3, b3 = params["w3"], params["b3"]
    N = w1.shape[0]
    if isinstance(x, (list, tuple)):
        xs = jnp.stack(x)
    else:
        xs = jnp.broadcast_to(x[None], (N,) + x.shape)
    h1 = jnp.einsum('nbd,ndh->nbh', xs, w1) + b1
    h1 = jnp.where(h1 > 0, h1, NEG_SLOPE * h1)
    h2 = jnp.einsum('nbh,nhk->nbk', h1, w2) + b2
    h2 = jnp.where(h2 > 0, h2, NEG_SLOPE * h2)
    return jnp.einsum('nbh,nhk->nbk', h2, w3) + b3   # (N, B, 1)


if __name__ == "__main__":
    key = jax.random.PRNGKey(0)
    k_param, k_x, k_x2, k_big = jax.random.split(key, 4)

    batch, input_dim, hidden_dim, net_num = 2, 16, 32, 3
    params = init_params(k_param, net_num, input_dim, hidden_dim)
    x = jax.random.normal(k_x, (batch, input_dim), jnp.float32)
    ref = _reference_forward(x, params)

    # --- f32 packed weights: tight parity with the f32 reference. ---
    packed_f32 = pack_params(params, matmul_dtype=jnp.float32)
    out_f32 = jax.block_until_ready(reward_nets_forward(x, packed_f32))
    assert out_f32.shape == (net_num, batch, 1)
    assert jnp.allclose(out_f32, ref, atol=1e-4, rtol=1e-4)

    # --- bf16 fast path (pre-cast weights, f32 accumulation): looser tol. ---
    packed_bf16 = pack_params(params, matmul_dtype=jnp.bfloat16)
    out_bf16 = jax.block_until_ready(reward_nets_forward(x, packed_bf16))
    assert out_bf16.shape == (net_num, batch, 1)
    assert jnp.allclose(out_bf16, ref, atol=3e-2, rtol=3e-2)

    # --- per-net input-list branch of the PyTorch forward (opt-in list out). ---
    x_list = [jax.random.normal(jax.random.fold_in(k_x2, i),
                                (batch, input_dim), jnp.float32)
              for i in range(net_num)]
    out_list = reward_nets_forward(x_list, packed_f32, return_list=True)
    out_list = [jax.block_until_ready(o) for o in out_list]
    ref_list = _reference_forward(x_list, params)
    assert len(out_list) == net_num
    for i in range(net_num):
        assert out_list[i].shape == (batch, 1)
        assert jnp.allclose(out_list[i], ref_list[i], atol=1e-4, rtol=1e-4)

    # --- larger batch: exercises batch padding, the B grid and the
    #     lane-dense 128-wide output blocks. ---
    x_big = jax.random.normal(k_big, (130, input_dim), jnp.float32)
    out_big = jax.block_until_ready(reward_nets_forward(x_big, packed_f32))
    ref_big = _reference_forward(x_big, params)
    assert out_big.shape == (net_num, 130, 1)
    assert jnp.allclose(out_big, ref_big, atol=1e-4, rtol=1e-4)

    print("KERNEL_OK")
</pallas_src>

<mosaic_0001>
module attributes {stable_mosaic.version = 11 : i64} {
  func.func @_reward_nets_kernel(%arg0: i32, %arg1: memref<8x16xf32, #tpu.memory_space<vmem>>, %arg2: memref<16x96xf32, #tpu.memory_space<vmem>>, %arg3: memref<96x96xf32, #tpu.memory_space<vmem>>, %arg4: memref<4x96xf32, #tpu.memory_space<vmem>>, %arg5: memref<3x8xf32, #tpu.memory_space<vmem>>) attributes {dimension_semantics = [#tpu.dimension_semantics<parallel>], iteration_bounds = array<i64: 1>, scalar_prefetch = 0 : i64, scratch_operands = 0 : i64, tpu.core_type = #tpu.core_type<tc>, window_params = [{transform_indices = @transform_0, window_bounds = array<i64: 8, 16>}, {pipeline_mode = #tpu.pipeline_mode<synchronous>, transform_indices = @transform_1, window_bounds = array<i64: 16, 96>}, {pipeline_mode = #tpu.pipeline_mode<synchronous>, transform_indices = @transform_2, window_bounds = array<i64: 96, 96>}, {pipeline_mode = #tpu.pipeline_mode<synchronous>, transform_indices = @transform_3, window_bounds = array<i64: 4, 96>}, {transform_indices = @transform_4, window_bounds = array<i64: 3, 8>}]} {
    %c0 = arith.constant 0 : index
    %c0_0 = arith.constant 0 : index
    %0 = vector.load %arg1[%c0, %c0_0] : memref<8x16xf32, #tpu.memory_space<vmem>>, vector<8x16xf32>
    %c0_1 = arith.constant 0 : index
    %c0_2 = arith.constant 0 : index
    %1 = vector.load %arg4[%c0_1, %c0_2] : memref<4x96xf32, #tpu.memory_space<vmem>>, vector<4x96xf32>
    %2 = vector.extract_strided_slice %1 {offsets = [0, 0], sizes = [1, 96], strides = [1, 1]} : vector<4x96xf32> to vector<1x96xf32>
    %3 = vector.extract_strided_slice %1 {offsets = [1, 0], sizes = [1, 96], strides = [1, 1]} : vector<4x96xf32> to vector<1x96xf32>
    %4 = vector.extract_strided_slice %1 {offsets = [2, 0], sizes = [1, 96], strides = [1, 1]} : vector<4x96xf32> to vector<1x96xf32>
    %5 = vector.extract_strided_slice %1 {offsets = [3, 0], sizes = [1, 96], strides = [1, 1]} : vector<4x96xf32> to vector<1x96xf32>
    %c0_3 = arith.constant 0 : index
    %c0_4 = arith.constant 0 : index
    %6 = vector.load %arg2[%c0_3, %c0_4] : memref<16x96xf32, #tpu.memory_space<vmem>>, vector<16x96xf32>
    %cst = arith.constant dense<0.000000e+00> : vector<8x96xf32>
    %7 = tpu.matmul %0, %6, %cst {dimension_numbers = #tpu.dot_dimension_numbers<[1], [0], [0], [1], [0, 0, 1, 1], [], []>} : vector<8x16xf32>, vector<16x96xf32>, vector<8x96xf32> -> vector<8x96xf32>
    %8 = vector.broadcast %2 : vector<1x96xf32> to vector<8x96xf32>
    %9 = arith.addf %7, %8 : vector<8x96xf32>
    %cst_5 = arith.constant 0.000000e+00 : f32
    %10 = vector.broadcast %cst_5 : f32 to vector<8x96xf32>
    %11 = arith.cmpf ogt, %9, %10 : vector<8x96xf32>
    %cst_6 = arith.constant 0.00999999977 : f32
    %12 = vector.broadcast %cst_6 : f32 to vector<8x96xf32>
    %13 = arith.mulf %12, %9 : vector<8x96xf32>
    %14 = arith.select %11, %9, %13 : vector<8x96xi1>, vector<8x96xf32>
    %c0_7 = arith.constant 0 : index
    %c0_8 = arith.constant 0 : index
    %15 = vector.load %arg3[%c0_7, %c0_8] : memref<96x96xf32, #tpu.memory_space<vmem>>, vector<96x96xf32>
    %cst_9 = arith.constant dense<0.000000e+00> : vector<8x96xf32>
    %16 = tpu.matmul %14, %15, %cst_9 {dimension_numbers = #tpu.dot_dimension_numbers<[1], [0], [0], [1], [0, 0, 1, 1], [], []>} : vector<8x96xf32>, vector<96x96xf32>, vector<8x96xf32> -> vector<8x96xf32>
    %17 = vector.broadcast %3 : vector<1x96xf32> to vector<8x96xf32>
    %18 = arith.addf %16, %17 : vector<8x96xf32>
    %cst_10 = arith.constant 0.000000e+00 : f32
    %19 = vector.broadcast %cst_10 : f32 to vector<8x96xf32>
    %20 = arith.cmpf ogt, %18, %19 : vector<8x96xf32>
    %cst_11 = arith.constant 0.00999999977 : f32
    %21 = vector.broadcast %cst_11 : f32 to vector<8x96xf32>
    %22 = arith.mulf %21, %18 : vector<8x96xf32>
    %23 = arith.select %20, %18, %22 : vector<8x96xi1>, vector<8x96xf32>
    %24 = vector.broadcast %4 : vector<1x96xf32> to vector<8x96xf32>
    %25 = arith.mulf %23, %24 : vector<8x96xf32>
    %26 = vector.broadcast %5 : vector<1x96xf32> to vector<8x96xf32>
    %27 = arith.addf %25, %26 : vector<8x96xf32>
    %28 = vector.extract_strided_slice %27 {offsets = [0, 0], sizes = [8, 32], strides = [1, 1]} : vector<8x96xf32> to vector<8x32xf32>
    %cst_12 = arith.constant dense<0.000000e+00> : vector<8xf32>
    %29 = vector.multi_reduction <add>, %28, %cst_12 [1] : vector<8x32xf32> to vector<8xf32>
    %30 = vector.shape_cast %29 : vector<8xf32> to vector<8x1xf32>
    %31 = vector.extract_strided_slice %27 {offsets = [0, 32], sizes = [8, 32], strides = [1, 1]} : vector<8x96xf32> to vector<8x32xf32>
    %cst_13 = arith.constant dense<0.000000e+00> : vector<8xf32>
    %32 = vector.multi_reduction <add>, %31, %cst_13 [1] : vector<8x32xf32> to vector<8xf32>
    %33 = vector.shape_cast %32 : vector<8xf32> to vector<8x1xf32>
    %34 = vector.extract_strided_slice %27 {offsets = [0, 64], sizes = [8, 32], strides = [1, 1]} : vector<8x96xf32> to vector<8x32xf32>
    %cst_14 = arith.constant dense<0.000000e+00> : vector<8xf32>
    %35 = vector.multi_reduction <add>, %34, %cst_14 [1] : vector<8x32xf32> to vector<8xf32>
    %36 = vector.shape_cast %35 : vector<8xf32> to vector<8x1xf32>
    %37 = tpu.concatenate %30, %33, %36 in 1 : vector<8x1xf32>, vector<8x1xf32>, vector<8x1xf32> -> vector<8x3xf32>
    %38 = tpu.transpose %37, [1, 0] : vector<8x3xf32> -> vector<3x8xf32>
    %c0_15 = arith.constant 0 : index
    %c0_16 = arith.constant 0 : index
    %39 = vector.load %arg5[%c0_15, %c0_16] : memref<3x8xf32, #tpu.memory_space<vmem>>, vector<3x8xf32>
    tpu.vector_store %arg5[%c0_15, %c0_16], %38 {strides = array<i32>} : memref<3x8xf32, #tpu.memory_space<vmem>>, vector<3x8xf32>,
    return
  }
  func.func @transform_0(%arg0: i32) -> (i32, i32) {
    %c0_i32 = arith.constant 0 : i32
    %c0_i32_0 = arith.constant 0 : i32
    return %arg0, %c0_i32 : i32, i32
  }
  func.func @transform_1(%arg0: i32) -> (i32, i32) {
    %c0_i32 = arith.constant 0 : i32
    %c0_i32_0 = arith.constant 0 : i32
    %c0_i32_1 = arith.constant 0 : i32
    return %c0_i32, %c0_i32_0 : i32, i32
  }
  func.func @transform_2(%arg0: i32) -> (i32, i32) {
    %c0_i32 = arith.constant 0 : i32
    %c0_i32_0 = arith.constant 0 : i32
    %c0_i32_1 = arith.constant 0 : i32
    return %c0_i32, %c0_i32_0 : i32, i32
  }
  func.func @transform_3(%arg0: i32) -> (i32, i32) {
    %c0_i32 = arith.constant 0 : i32
    %c0_i32_0 = arith.constant 0 : i32
    %c0_i32_1 = arith.constant 0 : i32
    return %c0_i32, %c0_i32_0 : i32, i32
  }
  func.func @transform_4(%arg0: i32) -> (i32, i32) {
    %c0_i32 = arith.constant 0 : i32
    %c0_i32_0 = arith.constant 0 : i32
    return %c0_i32, %arg0 : i32, i32
  }
}

</mosaic_0001>

<llo_original>
// kernel: tpu_custom_call.1
$region0: #{tpu_custom_call.1}
  #allocation0 [shape = 'u32[]', space=smem, size = 0x4, offset = 0x4, fixed_abs, tag = 'smem constant byte address 0x4 - core index']
  #allocation1 [shape = 'u32[144,128]{1,0:T(1,128)}', space=vmem, size = 0x12000, scoped, tag = 'internal scratch']
  %s0 = inlined_call_operand.hbm [shape: f32[8,16], index: 0, kind: input, shape index: {}]
  %s1 = inlined_call_operand.hbm [shape: f32[16,96], index: 1, kind: input, shape index: {}]
  %s2 = inlined_call_operand.hbm [shape: f32[96,96], index: 2, kind: input, shape index: {}]
  %s3 = inlined_call_operand.vmem [shape: f32[4,96], index: 3, kind: input, shape index: {}]
  %s4 = inlined_call_operand.hbm [shape: f32[3,8], index: 4, kind: output, shape index: {}]
  %s5 = sld [smem:[#allocation0]]
  $region38: #{tpu_custom_call.1} parent=0
    _
  %s7 = ssub.s32 1, %s5
  %s8 = scalar_select 0, %s7, %s5
  $region1: #{tpu_custom_call.1} parent=0
    #allocation2 [shape = 'u8[4096]{0}', space=vmem, size = 0x1000, scoped, tag = 'input window, operand 0, single buffered']
    #allocation3 [shape = 's32[1]{0}', space=sflag, size = 0x4, scoped, tag = 'scoped memory for tpu_custom_call.1']
    #allocation4 [shape = 's32[1]{0}', space=sflag, size = 0x4, scoped, tag = 'scoped memory for tpu_custom_call.1']
    #allocation5 [shape = 'u8[8192]{0}', space=vmem, size = 0x2000, scoped, tag = 'input window, operand 1, single buffered']
    #allocation6 [shape = 's32[1]{0}', space=sflag, size = 0x4, scoped, tag = 'scoped memory for tpu_custom_call.1']
    #allocation7 [shape = 'u8[49152]{0}', space=vmem, size = 0xc000, scoped, tag = 'input window, operand 2, single buffered']
    #allocation8 [shape = 'u8[2048]{0}', space=vmem, size = 0x800, scoped, tag = 'output window, operand 0, single buffered']
    %9 = vsyncpa [#allocation3], 0
    %10 = vsyncpa [#allocation6], 0
    %11 = vsyncpa [#allocation4], 0
    // Predicated region
    $region2: #{tpu_custom_call.1} parent=1 // pred_check
      _
    $region3: #{tpu_custom_call.1} parent=1 // pred_check_branch
      %13 = sbr.rel (0) target = $region5
    $region4: #{tpu_custom_call.1} parent=1 // pred_region
      %s15 = ssub.s32 128, 128
      %16 = vsyncadd [#allocation3], %s15
      %s18 = sshll.u32 [#allocation2], 4
      %s19 = int_to_ptr.vmem [resolvable:$true] %s18
      %21 = dma.hbm_to_vmem [thread:$0]  %s0, 128, %s19, [#allocation3]
    $region5: #{tpu_custom_call.1} parent=1 // pred_fallthru
      _
    // Predicated region
    $region6: #{tpu_custom_call.1} parent=1 // pred_check
      _
    $region7: #{tpu_custom_call.1} parent=1 // pred_check_branch
      %23 = sbr.rel (0) target = $region9
    $region8: #{tpu_custom_call.1} parent=1 // pred_region
      %s25 = ssub.s32 256, 256
      %26 = vsyncadd [#allocation6], %s25
      %s27 = sshll.u32 [#allocation5], 4
      %s28 = int_to_ptr.vmem [resolvable:$true] %s27
      %33 = dma.hbm_to_vmem [thread:$0]  %s1, 256, %s28, [#allocation6], 128, 128, 8
    $region9: #{tpu_custom_call.1} parent=1 // pred_fallthru
      _
    // Predicated region
    $region10: #{tpu_custom_call.1} parent=1 // pred_check
      _
    $region11: #{tpu_custom_call.1} parent=1 // pred_check_branch
      %35 = sbr.rel (0) target = $region13
    $region12: #{tpu_custom_call.1} parent=1 // pred_region
      %s37 = ssub.s32 1536, 1536
      %38 = vsyncadd [#allocation6], %s37
      %s39 = sshll.u32 [#allocation7], 4
      %s40 = int_to_ptr.vmem [resolvable:$true] %s39
      %45 = dma.hbm_to_vmem [thread:$0]  %s2, 1536, %s40, [#allocation6], 128, 128, 8
    $region13: #{tpu_custom_call.1} parent=1 // pred_fallthru
      _
    // Predicated region
    $region14: #{tpu_custom_call.1} parent=1 // pred_check
      _
    $region15: #{tpu_custom_call.1} parent=1 // pred_check_branch
      %47 = sbr.rel (0) target = $region17
    $region16: #{tpu_custom_call.1} parent=1 // pred_region
      _
    $region17: #{tpu_custom_call.1} parent=1 // pred_fallthru
      _
    // Predicated region
    $region18: #{tpu_custom_call.1} parent=1 // pred_check
      _
    $region19: #{tpu_custom_call.1} parent=1 // pred_check_branch
      %49 = sbr.rel (0) target = $region21
    $region20: #{tpu_custom_call.1} parent=1 // pred_region
      %50 = dma.done [#allocation3], 128
    $region21: #{tpu_custom_call.1} parent=1 // pred_fallthru
      _
    // Predicated region
    $region22: #{tpu_custom_call.1} parent=1 // pred_check
      _
    $region23: #{tpu_custom_call.1} parent=1 // pred_check_branch
      %52 = sbr.rel (0) target = $region25
    $region24: #{tpu_custom_call.1} parent=1 // pred_region
      %53 = dma.done [#allocation6], 256
    $region25: #{tpu_custom_call.1} parent=1 // pred_fallthru
      _
    // Predicated region
    $region26: #{tpu_custom_call.1} parent=1 // pred_check
      _
    $region27: #{tpu_custom_call.1} parent=1 // pred_check_branch
      %55 = sbr.rel (0) target = $region29
    $region28: #{tpu_custom_call.1} parent=1 // pred_region
      %56 = dma.done [#allocation6], 1536
    $region29: #{tpu_custom_call.1} parent=1 // pred_fallthru
      _
    %v57 = vld [vmem:[#allocation2] sm:$0xff]
    %v58 = vld [vmem:[%s3] sm:$0xf]
    %v59 = vld [vmem:[#allocation5] sm:$0xff]
    %v60 = vld [vmem:[#allocation5 + $0x8] sm:$0xff]
    %v61 = vlaneseq
    %v62 = vshrl.u32 %v61, 7
    %v63 = vsub.s32 0, %v62
    %v64 = vrot.slane %v58, %v63
    %vm65 = vcmask 130048
    %v67 = vsel %vm65, %v57, 0
    %69 = vmatprep.subr.mxu0 0.0
    %70 = vmatpush1.msra.mxu0 0.0
    %71 = vmatprep.subr.mxu0 0.0
    %72 = vmatpush1.msra.mxu0 0.0
    %73 = vmatprep.subr.mxu0 0.0
    %74 = vmatpush1.msra.mxu0 0.0
    %75 = vmatprep.subr.mxu0 0.0
    %76 = vmatpush1.msra.mxu0 0.0
    %77 = vmatprep.subr.mxu0 0.0
    %78 = vmatpush1.msra.mxu0 0.0
    %79 = vmatprep.subr.mxu0 0.0
    %80 = vmatpush1.msra.mxu0 0.0
    %81 = vmatprep.subr.mxu0 0.0
    %82 = vmatpush1.msra.mxu0 0.0
    %83 = vmatprep.subr.mxu0 0.0
    %84 = vmatpush1.msra.mxu0 0.0
    %85 = vmatprep.subr.mxu0 0.0
    %86 = vmatpush1.msra.mxu0 0.0
    %87 = vmatprep.subr.mxu0 0.0
    %88 = vmatpush1.msra.mxu0 0.0
    %89 = vmatprep.subr.mxu0 0.0
    %90 = vmatpush1.msra.mxu0 0.0
    %91 = vmatprep.subr.mxu0 0.0
    %92 = vmatpush1.msra.mxu0 0.0
    %93 = vmatprep.subr.mxu0 0.0
    %94 = vmatpush1.msra.mxu0 0.0
    %95 = vmatprep.subr.mxu0 0.0
    %96 = vmatpush1.msra.mxu0 0.0
    %97 = vmatprep.subr.mxu0 0.0
    %98 = vmatpush1.msra.mxu0 %v60
    %99 = vmatprep.subr.mxu0 0.0
    %100 = vmatpush1.msra.mxu0 %v59
    %101 = vmatprep.subr.mxu0 0.0
    %102 = vmatpush2.msra.mxu0 0.0
    %103 = vmatprep.subr.mxu0 0.0
    %104 = vmatpush2.msra.mxu0 0.0
    %105 = vmatprep.subr.mxu0 0.0
    %106 = vmatpush2.msra.mxu0 0.0
    %107 = vmatprep.subr.mxu0 0.0
    %108 = vmatpush2.msra.mxu0 0.0
    %109 = vmatprep.subr.mxu0 0.0
    %110 = vmatpush2.msra.mxu0 0.0
    %111 = vmatprep.subr.mxu0 0.0
    %112 = vmatpush2.msra.mxu0 0.0
    %113 = vmatprep.subr.mxu0 0.0
    %114 = vmatpush2.msra.mxu0 0.0
    %115 = vmatprep.subr.mxu0 0.0
    %116 = vmatpush2.msra.mxu0 0.0
    %117 = vmatprep.subr.mxu0 0.0
    %118 = vmatpush2.msra.mxu0 0.0
    %119 = vmatprep.subr.mxu0 0.0
    %120 = vmatpush2.msra.mxu0 0.0
    %121 = vmatprep.subr.mxu0 0.0
    %122 = vmatpush2.msra.mxu0 0.0
    %123 = vmatprep.subr.mxu0 0.0
    %124 = vmatpush2.msra.mxu0 0.0
    %125 = vmatprep.subr.mxu0 0.0
    %126 = vmatpush2.msra.mxu0 0.0
    %127 = vmatprep.subr.mxu0 0.0
    %128 = vmatpush2.msra.mxu0 0.0
    %129 = vmatprep.subr.mxu0 0.0
    %130 = vmatpush2.msra.mxu0 0.0
    %131 = vmatprep.subr.mxu0 0.0
    %132 = vmatpush2.msra.mxu0 0.0
    %133 = vmatprep.mubr.f32.mxu0 0.0
    %134 = vmatmul.mubr.f32.gmra.mxu0 %v67
    %v135 = vpop.f32.mrf.mxu0
    %v136 = vadd.f32 %v64, %v135
    %v137 = vpop.f32.mrf.mxu0
    %138 = vdwg.mxu0
    %vm139 = vcmp.gt.f32.partialorder %v136, 0.0
    %v140 = vmul.f32 %v136, 0.01
    %v141 = vsel %vm139, %v136, %v140
    %v142 = vld [vmem:[#allocation7] sm:$0xff]
    %v143 = vld [vmem:[#allocation7 + $0x8] sm:$0xff]
    %v144 = vld [vmem:[#allocation7 + $0x10] sm:$0xff]
    %v145 = vld [vmem:[#allocation7 + $0x18] sm:$0xff]
    %v146 = vld [vmem:[#allocation7 + $0x20] sm:$0xff]
    %v147 = vld [vmem:[#allocation7 + $0x28] sm:$0xff]
    %v148 = vld [vmem:[#allocation7 + $0x30] sm:$0xff]
    %v149 = vld [vmem:[#allocation7 + $0x38] sm:$0xff]
    %v150 = vld [vmem:[#allocation7 + $0x40] sm:$0xff]
    %v151 = vld [vmem:[#allocation7 + $0x48] sm:$0xff]
    %v152 = vld [vmem:[#allocation7 + $0x50] sm:$0xff]
    %v153 = vld [vmem:[#allocation7 + $0x58] sm:$0xff]
    %v154 = vlaneseq
    %v155 = vshrl.u32 %v154, 7
    %v156 = vsub.s32 1, %v155
    %v157 = vrot.slane %v58, %v156
    %vm158 = vcmask 785408
    %v160 = vsel %vm158, %v141, 0
    %162 = vmatprep.subr.mxu0 0.0
    %163 = vmatpush1.msra.mxu0 0.0
    %164 = vmatprep.subr.mxu0 0.0
    %165 = vmatpush1.msra.mxu0 0.0
    %166 = vmatprep.subr.mxu0 0.0
    %167 = vmatpush1.msra.mxu0 0.0
    %168 = vmatprep.subr.mxu0 0.0
    %169 = vmatpush1.msra.mxu0 0.0
    %170 = vmatprep.subr.mxu0 0.0
    %171 = vmatpush1.msra.mxu0 %v153
    %172 = vmatprep.subr.mxu0 0.0
    %173 = vmatpush1.msra.mxu0 %v152
    %174 = vmatprep.subr.mxu0 0.0
    %175 = vmatpush1.msra.mxu0 %v151
    %176 = vmatprep.subr.mxu0 0.0
    %177 = vmatpush1.msra.mxu0 %v150
    %178 = vmatprep.subr.mxu0 0.0
    %179 = vmatpush1.msra.mxu0 %v149
    %180 = vmatprep.subr.mxu0 0.0
    %181 = vmatpush1.msra.mxu0 %v148
    %182 = vmatprep.subr.mxu0 0.0
    %183 = vmatpush1.msra.mxu0 %v147
    %184 = vmatprep.subr.mxu0 0.0
    %185 = vmatpush1.msra.mxu0 %v146
    %186 = vmatprep.subr.mxu0 0.0
    %187 = vmatpush1.msra.mxu0 %v145
    %188 = vmatprep.subr.mxu0 0.0
    %189 = vmatpush1.msra.mxu0 %v144
    %190 = vmatprep.subr.mxu0 0.0
    %191 = vmatpush1.msra.mxu0 %v143
    %192 = vmatprep.subr.mxu0 0.0
    %193 = vmatpush1.msra.mxu0 %v142
    %194 = vmatprep.subr.mxu0 0.0
    %195 = vmatpush2.msra.mxu0 0.0
    %196 = vmatprep.subr.mxu0 0.0
    %197 = vmatpush2.msra.mxu0 0.0
    %198 = vmatprep.subr.mxu0 0.0
    %199 = vmatpush2.msra.mxu0 0.0
    %200 = vmatprep.subr.mxu0 0.0
    %201 = vmatpush2.msra.mxu0 0.0
    %202 = vmatprep.subr.mxu0 0.0
    %203 = vmatpush2.msra.mxu0 0.0
    %204 = vmatprep.subr.mxu0 0.0
    %205 = vmatpush2.msra.mxu0 0.0
    %206 = vmatprep.subr.mxu0 0.0
    %207 = vmatpush2.msra.mxu0 0.0
    %208 = vmatprep.subr.mxu0 0.0
    %209 = vmatpush2.msra.mxu0 0.0
    %210 = vmatprep.subr.mxu0 0.0
    %211 = vmatpush2.msra.mxu0 0.0
    %212 = vmatprep.subr.mxu0 0.0
    %213 = vmatpush2.msra.mxu0 0.0
    %214 = vmatprep.subr.mxu0 0.0
    %215 = vmatpush2.msra.mxu0 0.0
    %216 = vmatprep.subr.mxu0 0.0
    %217 = vmatpush2.msra.mxu0 0.0
    %218 = vmatprep.subr.mxu0 0.0
    %219 = vmatpush2.msra.mxu0 0.0
    %220 = vmatprep.subr.mxu0 0.0
    %221 = vmatpush2.msra.mxu0 0.0
    %222 = vmatprep.subr.mxu0 0.0
    %223 = vmatpush2.msra.mxu0 0.0
    %224 = vmatprep.subr.mxu0 0.0
    %225 = vmatpush2.msra.mxu0 0.0
    %226 = vmatprep.mubr.f32.mxu0 0.0
    %227 = vmatmul.mubr.f32.gmra.mxu0 %v160
    %v228 = vpop.f32.mrf.mxu0
    %v229 = vadd.f32 %v157, %v228
    %v230 = vpop.f32.mrf.mxu0
    %231 = vdwg.mxu0
    %vm232 = vcmp.gt.f32.partialorder %v229, 0.0
    %v233 = vmul.f32 %v229, 0.01
    %v234 = vsel %vm232, %v229, %v233
    %v235 = vlaneseq
    %v236 = vshrl.u32 %v235, 7
    %v237 = vsub.s32 2, %v236
    %v238 = vrot.slane %v58, %v237
    %v239 = vmul.f32 %v234, %v238
    %v240 = vlaneseq
    %v241 = vshrl.u32 %v240, 7
    %v242 = vsub.s32 3, %v241
    %v243 = vrot.slane %v58, %v242
    %v244 = vadd.f32 %v239, %v243
    %vm245 = vcmask 261120
    %v246 = vsel %vm245, %v244, 0.0
    %247 = vadd.xlane.f32.xlu0 %v246
    %v248 = vpop.xlane.xlu0 %247
    %250 = vrot.lane.b32.xlu0 %v244, 96
    %v251 = vpop.permute.xlu0 %250
    %v253 = vsel %vm245, %v251, 0.0
    %254 = vadd.xlane.f32.xlu0 %v253
    %v255 = vpop.xlane.xlu0 %254
    %256 = vrot.lane.b32.xlu0 %v244, 64
    %v257 = vpop.permute.xlu0 %256
    %v259 = vsel %vm245, %v257, 0.0
    %260 = vadd.xlane.f32.xlu0 %v259
    %v261 = vpop.xlane.xlu0 %260
    %vm262 = vcmask 7168
    %v263 = vsel %vm262, %v248, %v255
    %vm264 = vcmask 15360
    %v265 = vsel %vm264, %v263, %v261
    %266 = vxpose.xlu0.b32.start [1/16] %v265, 128
    %267 = vxpose.xlu0.b32.cont [2/16] 0.0, 128
    %268 = vxpose.xlu0.b32.cont [3/16] 0.0, 128
    %269 = vxpose.xlu0.b32.cont [4/16] 0.0, 128
    %270 = vxpose.xlu0.b32.cont [5/16] 0.0, 128
    %271 = vxpose.xlu0.b32.cont [6/16] 0.0, 128
    %272 = vxpose.xlu0.b32.cont [7/16] 0.0, 128
    %273 = vxpose.xlu0.b32.cont [8/16] 0.0, 128
    %274 = vxpose.xlu0.b32.cont [9/16] 0.0, 128
    %275 = vxpose.xlu0.b32.cont [10/16] 0.0, 128
    %276 = vxpose.xlu0.b32.cont [11/16] 0.0, 128
    %277 = vxpose.xlu0.b32.cont [12/16] 0.0, 128
    %278 = vxpose.xlu0.b32.cont [13/16] 0.0, 128
    %279 = vxpose.xlu0.b32.cont [14/16] 0.0, 128
    %280 = vxpose.xlu0.b32.cont [15/16] 0.0, 128
    %281 = vxpose.xlu0.b32.end [16/16] 0.0, 128
    %v282 = vpop.trf.xlu0
    %v283 = vpop.trf.xlu0
    %v284 = vpop.trf.xlu0
    %v285 = vpop.trf.xlu0
    %v286 = vpop.trf.xlu0
    %v287 = vpop.trf.xlu0
    %v288 = vpop.trf.xlu0
    %v289 = vpop.trf.xlu0
    %v290 = vpop.trf.xlu0
    %v291 = vpop.trf.xlu0
    %v292 = vpop.trf.xlu0
    %v293 = vpop.trf.xlu0
    %v294 = vpop.trf.xlu0
    %v295 = vpop.trf.xlu0
    %v296 = vpop.trf.xlu0
    %v297 = vpop.trf.xlu0
    %vm298 = vcmask 59392
    %299 = vst.msk [vmem:[#allocation8] sm:$0x7] %vm298, %v282
    // Predicated region
    $region30: #{tpu_custom_call.1} parent=1 // pred_check
      _
    $region31: #{tpu_custom_call.1} parent=1 // pred_check_branch
      %301 = sbr.rel (0) target = $region33
    $region32: #{tpu_custom_call.1} parent=1 // pred_region
      %s303 = ssub.s32 64, 64
      %304 = vsyncadd [#allocation4], %s303
      %s306 = sshll.u32 [#allocation8], 4
      %s307 = int_to_ptr.vmem [resolvable:$true] %s306
      %309 = dma.vmem_to_hbm [thread:$0]  %s307, 64, %s4, [#allocation4]
    $region33: #{tpu_custom_call.1} parent=1 // pred_fallthru
      _
    // Predicated region
    $region34: #{tpu_custom_call.1} parent=1 // pred_check
      _
    $region35: #{tpu_custom_call.1} parent=1 // pred_check_branch
      %311 = sbr.rel (0) target = $region37
    $region36: #{tpu_custom_call.1} parent=1 // pred_region
      %312 = dma.done [#allocation4], 64
    $region37: #{tpu_custom_call.1} parent=1 // pred_fallthru
      _
    %313 = vsyncpa [#allocation3], 1
    %314 = vsyncpa [#allocation6], 1
    %315 = vsyncpa [#allocation4], 1

</llo_original>
